<compile_context>
chip_gen: v6e
topology: v6e:2x2x1
jax: 0.10.0
libtpu: 0.0.40
codegen_flags: <defaults>
</compile_context>

<pallas_src>
import functools

import jax
import jax.numpy as jnp
from jax.experimental import pallas as pl
from jax.experimental.pallas import tpu as pltpu


MLP_LAYERS = [1, 32, 32, 1]   # first and last must be 1 (per the module's asserts)


# ----------------------------------------------------------------------------- kernel
def _value_layer_kernel(groups, n_layers, compute_dtype, x_ref, *refs):
    """x_ref: (G, TC); refs = w0,b0, w1p,b1p, ..., wlast_p,blast, out_ref."""
    out_ref = refs[-1]
    p = refs[:-1]                               # interleaved (w, b) per layer

    x = x_ref[...].astype(compute_dtype)        # (G, TC) lane-dense tile
    tc = x.shape[-1]

    # ---- layer 0: Linear(1, H0) on the VPU ----------------------------------
    # (1, H0, 1) * (G, 1, TC) -> (G, H0, TC): sublane / lane broadcasts only,
    # then a contiguous leading-dim merge to (G*H0, TC) (no transpose).
    w0 = p[0][...]                              # (H0, 1) compute_dtype
    b0 = p[1][...]                              # (H0, 1) compute_dtype
    h0 = w0[None, :, :] * x[:, None, :] + b0[None, :, :]
    h = jnp.maximum(h0, 0.0).reshape(groups * w0.shape[0], tc)   # (G*H0, TC)

    # ---- hidden layers: block-diagonal packed Linear(H, H) on the MXU -------
    for li in range(1, n_layers - 1):
        wp = p[2 * li][...]                     # (G*H_out, G*H_in)  mxu dtype
        bp = p[2 * li + 1][...]                 # (G*H_out, 1)       f32
        acc = jnp.dot(wp, h.astype(wp.dtype), preferred_element_type=jnp.float32)
        h = jnp.maximum(acc + bp, 0.0).astype(compute_dtype)

    # ---- last layer: block-diagonal packed Linear(H_in, 1) as one MXU dot ---
    wl = p[-2][...]                             # (G, G*H_in)  mxu dtype
    bl = p[-1][...]                             # (1, 1)       f32
    out = jnp.dot(wl, h.astype(wl.dtype), preferred_element_type=jnp.float32) + bl
    out_ref[...] = out.astype(out_ref.dtype)    # full-tile unmasked store


# ----------------------------------------------------------------------------- config / packing
def _const_block(i):
    return (0, 0)


def _tpu_generation():
    try:
        kind = jax.devices()[0].device_kind.lower()
    except Exception:
        return 6
    if "v7" in kind or "7x" in kind:
        return 7
    if "v6" in kind:
        return 6
    if "v5" in kind:
        return 5
    if "v4" in kind:
        return 4
    return 6


def _default_config():
    gen = _tpu_generation()
    if gen <= 5:
        # 128x128 MXUs: 4-group pack (1/4 dense); no bf16 VALU -> f32 elementwise.
        return dict(groups=4, lane_tile=4096, compute_dtype=jnp.float32,
                    vmem_limit_bytes=64 << 20, min_grid_steps=1)
    if gen == 6:
        return dict(groups=8, lane_tile=4096, compute_dtype=jnp.bfloat16,
                    vmem_limit_bytes=64 << 20, min_grid_steps=1)
    # v7x: 64 MiB VMEM per TC and 2 TCs -> tighter limit, keep >=2 grid steps.
    return dict(groups=8, lane_tile=4096, compute_dtype=jnp.bfloat16,
                vmem_limit_bytes=48 << 20, min_grid_steps=2)


def _pack_params(weights, biases, groups, mxu_dtype, compute_dtype):
    """Host-side packing of the MLP params for the packed kernel."""
    n_layers = len(weights)
    ops = []
    # Layer 0: native (H0, 1) column layout for the VPU broadcast (compute dtype).
    ops.append(jnp.asarray(weights[0], jnp.float32).reshape(-1, 1).astype(compute_dtype))
    ops.append(jnp.asarray(biases[0], jnp.float32).reshape(-1, 1).astype(compute_dtype))
    # Hidden layers: block-diagonal replication (G copies) to fill the MXU.
    eye = jnp.eye(groups, dtype=jnp.float32)
    for li in range(1, n_layers - 1):
        w = jnp.asarray(weights[li], jnp.float32)                 # (out, in)
        ops.append(jnp.kron(eye, w).astype(mxu_dtype))            # (G*out, G*in)
        ops.append(jnp.tile(jnp.asarray(biases[li], jnp.float32).reshape(-1, 1),
                            (groups, 1)))                         # (G*out, 1) f32
    # Last layer (out=1): block-diagonal (G, G*H_in) so the epilogue is one MXU dot.
    w_last = jnp.asarray(weights[-1], jnp.float32).reshape(1, -1)  # (1, H_in)
    ops.append(jnp.kron(eye, w_last).astype(mxu_dtype))            # (G, G*H_in)
    ops.append(jnp.asarray(biases[-1], jnp.float32).reshape(1, 1))
    specs = [pl.BlockSpec(op.shape, _const_block) for op in ops]
    return ops, specs


# ----------------------------------------------------------------------------- wrapper
def value_layer_forward(x, weights, biases, *, groups=None, lane_tile=None,
                        compute_dtype=None, mxu_dtype=jnp.bfloat16,
                        vmem_limit_bytes=None, min_grid_steps=None):
    """Apply the ValueLayer MLP elementwise to `x` (any shape)."""
    assert len(weights) == len(biases) and len(weights) >= 2
    cfg = _default_config()
    groups = cfg["groups"] if groups is None else groups
    lane_tile = cfg["lane_tile"] if lane_tile is None else lane_tile
    compute_dtype = cfg["compute_dtype"] if compute_dtype is None else compute_dtype
    vmem_limit_bytes = (cfg["vmem_limit_bytes"] if vmem_limit_bytes is None
                        else vmem_limit_bytes)
    min_grid_steps = cfg["min_grid_steps"] if min_grid_steps is None else min_grid_steps

    orig_shape = x.shape
    n = int(x.size)
    n_layers = len(weights)

    # Lane tile: large (groups*tc elems/step) to amortise per-step overhead,
    # shrunk for small inputs; always a multiple of 128 lanes.  On v7x we also
    # split so the single grid axis has >=2 steps (megacore sharding).
    cols_needed = max(1, pl.cdiv(n, groups))
    cols_aligned = pl.cdiv(cols_needed, 128) * 128
    tc = min(lane_tile, cols_aligned)
    if (min_grid_steps > 1 and cols_aligned // tc < min_grid_steps
            and cols_aligned >= min_grid_steps * 128):
        tc = pl.cdiv(pl.cdiv(cols_aligned, min_grid_steps), 128) * 128
    n_cols = pl.cdiv(cols_aligned, tc) * tc
    n_pad = groups * n_cols
    grid = (n_cols // tc,)

    # jnp.pad (fuses well) instead of a scatter-into-zeros extra HBM pass.
    xf = jnp.pad(jnp.reshape(x, (-1,)).astype(jnp.float32), (0, n_pad - n))
    x2d = xf.reshape(groups, n_cols)

    wb_ops, wb_specs = _pack_params(weights, biases, groups, mxu_dtype, compute_dtype)

    out2d = pl.pallas_call(
        functools.partial(_value_layer_kernel, groups, n_layers, compute_dtype),
        out_shape=jax.ShapeDtypeStruct((groups, n_cols), jnp.float32),
        grid=grid,
        in_specs=[pl.BlockSpec((groups, tc), lambda i: (0, i))] + wb_specs,
        out_specs=pl.BlockSpec((groups, tc), lambda i: (0, i)),
        compiler_params=pltpu.CompilerParams(
            dimension_semantics=("parallel",),
            vmem_limit_bytes=vmem_limit_bytes),
    )(x2d, *wb_ops)

    out = out2d.reshape(-1)[:n].reshape(orig_shape)
    return jnp.squeeze(out)   # mirrors the module's .squeeze()


# ----------------------------------------------------------------------------- params / reference
def init_params(mlp_layers, key):
    """Deterministic init matching nn.Linear shapes: W (out, in), b (out,)."""
    # TODO(synk): the original module may load weights from trilinear_init.pth;
    # here we use a deterministic random init (forward semantics are identical).
    weights, biases = [], []
    in_c = mlp_layers[0]
    for out_c in mlp_layers[1:]:
        key, kw, kb = jax.random.split(key, 3)
        bound = 1.0 / jnp.sqrt(jnp.float32(in_c))
        weights.append(jax.random.uniform(kw, (out_c, in_c), jnp.float32,
                                          -bound, bound))
        biases.append(jax.random.uniform(kb, (out_c,), jnp.float32,
                                         -bound, bound))
        in_c = out_c
    return weights, biases


def value_layer_ref(x, weights, biases):
    """Pure-JAX f32 reference of the PyTorch forward (for verification)."""
    h = x.astype(jnp.float32)[None, ..., None]       # x[None, ..., None]
    n_layers = len(weights)
    for i in range(n_layers):
        h = h @ weights[i].T + biases[i]             # nn.Linear
        if i < n_layers - 1:
            h = jnp.maximum(h, 0.0)                  # ReLU
    return jnp.squeeze(h)                            # .squeeze()


# ----------------------------------------------------------------------------- main
if __name__ == "__main__":
    key = jax.random.PRNGKey(0)
    key, kx, kx2 = jax.random.split(key, 3)
    weights, biases = init_params(MLP_LAYERS, key)

    # Small input consistent with how the module is driven (ts ~ U(-1, 1), 2-D).
    x = jax.random.uniform(kx, (2, 256), jnp.float32, -1.0, 1.0)
    out = jax.block_until_ready(value_layer_forward(x, weights, biases))
    ref = value_layer_ref(x, weights, biases)
    assert out.shape == ref.shape, (out.shape, ref.shape)
    # bf16 MXU operands (f32 accumulation) and a bf16 elementwise path on
    # v6e/v7x -> relaxed tolerance vs the f32 reference.
    assert jnp.allclose(out, ref, atol=3e-2, rtol=3e-2), \
        ("mismatch", float(jnp.max(jnp.abs(out - ref))))

    # A second, ragged shape exercising tail padding (and >1 grid step on v7x).
    x2 = jax.random.uniform(kx2, (3, 5000), jnp.float32, -1.0, 1.0)
    out2 = jax.block_until_ready(value_layer_forward(x2, weights, biases))
    ref2 = value_layer_ref(x2, weights, biases)
    assert out2.shape == ref2.shape, (out2.shape, ref2.shape)
    assert jnp.allclose(out2, ref2, atol=3e-2, rtol=3e-2), \
        ("mismatch", float(jnp.max(jnp.abs(out2 - ref2))))

    print("KERNEL_OK")
</pallas_src>

<mosaic_0001>
module attributes {stable_mosaic.version = 11 : i64} {
  func.func @_value_layer_kernel(%arg0: i32, %arg1: memref<8x128xf32, #tpu.memory_space<vmem>>, %arg2: memref<32x1xbf16, #tpu.memory_space<vmem>>, %arg3: memref<32x1xbf16, #tpu.memory_space<vmem>>, %arg4: memref<256x256xbf16, #tpu.memory_space<vmem>>, %arg5: memref<256x1xf32, #tpu.memory_space<vmem>>, %arg6: memref<8x256xbf16, #tpu.memory_space<vmem>>, %arg7: memref<1x1xf32, #tpu.memory_space<vmem>>, %arg8: memref<8x128xf32, #tpu.memory_space<vmem>>) attributes {dimension_semantics = [#tpu.dimension_semantics<parallel>], iteration_bounds = array<i64: 1>, scalar_prefetch = 0 : i64, scratch_operands = 0 : i64, tpu.core_type = #tpu.core_type<tc>, window_params = [{transform_indices = @transform_0, window_bounds = array<i64: 8, 128>}, {pipeline_mode = #tpu.pipeline_mode<synchronous>, transform_indices = @transform_1, window_bounds = array<i64: 32, 1>}, {pipeline_mode = #tpu.pipeline_mode<synchronous>, transform_indices = @transform_2, window_bounds = array<i64: 32, 1>}, {pipeline_mode = #tpu.pipeline_mode<synchronous>, transform_indices = @transform_3, window_bounds = array<i64: 256, 256>}, {pipeline_mode = #tpu.pipeline_mode<synchronous>, transform_indices = @transform_4, window_bounds = array<i64: 256, 1>}, {pipeline_mode = #tpu.pipeline_mode<synchronous>, transform_indices = @transform_5, window_bounds = array<i64: 8, 256>}, {pipeline_mode = #tpu.pipeline_mode<synchronous>, transform_indices = @transform_6, window_bounds = array<i64: 1, 1>}, {transform_indices = @transform_7, window_bounds = array<i64: 8, 128>}]} {
    %c0 = arith.constant 0 : index
    %c0_0 = arith.constant 0 : index
    %0 = vector.load %arg1[%c0, %c0_0] : memref<8x128xf32, #tpu.memory_space<vmem>>, vector<8x128xf32>
    %1 = arith.truncf %0 : vector<8x128xf32> to vector<8x128xbf16>
    %c0_1 = arith.constant 0 : index
    %c0_2 = arith.constant 0 : index
    %2 = vector.load %arg2[%c0_1, %c0_2] : memref<32x1xbf16, #tpu.memory_space<vmem>>, vector<32x1xbf16>
    %c0_3 = arith.constant 0 : index
    %c0_4 = arith.constant 0 : index
    %3 = vector.load %arg3[%c0_3, %c0_4] : memref<32x1xbf16, #tpu.memory_space<vmem>>, vector<32x1xbf16>
    %4 = vector.shape_cast %2 : vector<32x1xbf16> to vector<1x32x1xbf16>
    %5 = vector.shape_cast %1 : vector<8x128xbf16> to vector<8x1x128xbf16>
    %6 = vector.broadcast %4 : vector<1x32x1xbf16> to vector<8x32x128xbf16>
    %7 = vector.broadcast %5 : vector<8x1x128xbf16> to vector<8x32x128xbf16>
    %8 = arith.mulf %6, %7 : vector<8x32x128xbf16>
    %9 = vector.shape_cast %3 : vector<32x1xbf16> to vector<1x32x1xbf16>
    %10 = vector.broadcast %9 : vector<1x32x1xbf16> to vector<8x32x128xbf16>
    %11 = arith.addf %8, %10 : vector<8x32x128xbf16>
    %cst = arith.constant 0.000000e+00 : bf16
    %12 = vector.broadcast %cst : bf16 to vector<8x32x128xbf16>
    %13 = arith.maximumf %11, %12 : vector<8x32x128xbf16>
    %14 = vector.shape_cast %13 : vector<8x32x128xbf16> to vector<256x128xbf16>
    %c0_5 = arith.constant 0 : index
    %c0_6 = arith.constant 0 : index
    %15 = vector.load %arg4[%c0_5, %c0_6] : memref<256x256xbf16, #tpu.memory_space<vmem>>, vector<256x256xbf16>
    %c0_7 = arith.constant 0 : index
    %c0_8 = arith.constant 0 : index
    %16 = vector.load %arg5[%c0_7, %c0_8] : memref<256x1xf32, #tpu.memory_space<vmem>>, vector<256x1xf32>
    %cst_9 = arith.constant dense<0.000000e+00> : vector<256x128xf32>
    %17 = tpu.matmul %15, %14, %cst_9 {dimension_numbers = #tpu.dot_dimension_numbers<[1], [0], [0], [1], [0, 0, 1, 1], [], []>} : vector<256x256xbf16>, vector<256x128xbf16>, vector<256x128xf32> -> vector<256x128xf32>
    %18 = vector.broadcast %16 : vector<256x1xf32> to vector<256x128xf32>
    %19 = arith.addf %17, %18 : vector<256x128xf32>
    %cst_10 = arith.constant 0.000000e+00 : f32
    %20 = vector.broadcast %cst_10 : f32 to vector<256x128xf32>
    %21 = arith.maximumf %19, %20 : vector<256x128xf32>
    %22 = arith.truncf %21 : vector<256x128xf32> to vector<256x128xbf16>
    %c0_11 = arith.constant 0 : index
    %c0_12 = arith.constant 0 : index
    %23 = vector.load %arg6[%c0_11, %c0_12] : memref<8x256xbf16, #tpu.memory_space<vmem>>, vector<8x256xbf16>
    %c0_13 = arith.constant 0 : index
    %c0_14 = arith.constant 0 : index
    %24 = vector.load %arg7[%c0_13, %c0_14] : memref<1x1xf32, #tpu.memory_space<vmem>>, vector<1x1xf32>
    %cst_15 = arith.constant dense<0.000000e+00> : vector<8x128xf32>
    %25 = tpu.matmul %23, %22, %cst_15 {dimension_numbers = #tpu.dot_dimension_numbers<[1], [0], [0], [1], [0, 0, 1, 1], [], []>} : vector<8x256xbf16>, vector<256x128xbf16>, vector<8x128xf32> -> vector<8x128xf32>
    %26 = vector.broadcast %24 : vector<1x1xf32> to vector<8x128xf32>
    %27 = arith.addf %25, %26 : vector<8x128xf32>
    %c0_16 = arith.constant 0 : index
    %c0_17 = arith.constant 0 : index
    %28 = vector.load %arg8[%c0_16, %c0_17] : memref<8x128xf32, #tpu.memory_space<vmem>>, vector<8x128xf32>
    tpu.vector_store %arg8[%c0_16, %c0_17], %27 {strides = array<i32>} : memref<8x128xf32, #tpu.memory_space<vmem>>, vector<8x128xf32>,
    return
  }
  func.func @transform_0(%arg0: i32) -> (i32, i32) {
    %c0_i32 = arith.constant 0 : i32
    %c0_i32_0 = arith.constant 0 : i32
    return %c0_i32, %arg0 : i32, i32
  }
  func.func @transform_1(%arg0: i32) -> (i32, i32) {
    %c0_i32 = arith.constant 0 : i32
    %c0_i32_0 = arith.constant 0 : i32
    %c0_i32_1 = arith.constant 0 : i32
    return %c0_i32, %c0_i32_0 : i32, i32
  }
  func.func @transform_2(%arg0: i32) -> (i32, i32) {
    %c0_i32 = arith.constant 0 : i32
    %c0_i32_0 = arith.constant 0 : i32
    %c0_i32_1 = arith.constant 0 : i32
    return %c0_i32, %c0_i32_0 : i32, i32
  }
  func.func @transform_3(%arg0: i32) -> (i32, i32) {
    %c0_i32 = arith.constant 0 : i32
    %c0_i32_0 = arith.constant 0 : i32
    %c0_i32_1 = arith.constant 0 : i32
    return %c0_i32, %c0_i32_0 : i32, i32
  }
  func.func @transform_4(%arg0: i32) -> (i32, i32) {
    %c0_i32 = arith.constant 0 : i32
    %c0_i32_0 = arith.constant 0 : i32
    %c0_i32_1 = arith.constant 0 : i32
    return %c0_i32, %c0_i32_0 : i32, i32
  }
  func.func @transform_5(%arg0: i32) -> (i32, i32) {
    %c0_i32 = arith.constant 0 : i32
    %c0_i32_0 = arith.constant 0 : i32
    %c0_i32_1 = arith.constant 0 : i32
    return %c0_i32, %c0_i32_0 : i32, i32
  }
  func.func @transform_6(%arg0: i32) -> (i32, i32) {
    %c0_i32 = arith.constant 0 : i32
    %c0_i32_0 = arith.constant 0 : i32
    %c0_i32_1 = arith.constant 0 : i32
    return %c0_i32, %c0_i32_0 : i32, i32
  }
  func.func @transform_7(%arg0: i32) -> (i32, i32) {
    %c0_i32 = arith.constant 0 : i32
    %c0_i32_0 = arith.constant 0 : i32
    return %c0_i32, %arg0 : i32, i32
  }
}

</mosaic_0001>

<llo_original>
// kernel: tpu_custom_call.1
$region0: #{tpu_custom_call.1}
  #allocation0 [shape = 'u32[]', space=smem, size = 0x4, offset = 0x4, fixed_abs, tag = 'smem constant byte address 0x4 - core index']
  #allocation1 [shape = 'u32[144,128]{1,0:T(1,128)}', space=vmem, size = 0x12000, scoped, tag = 'internal scratch']
  #allocation2 [shape = 'f32[1,1]{1,0:T(1,128)S(1)}', space=vmem, size = 0x200, scoped, tag = 'scoped memory for tpu_custom_call.1']
  %s0 = inlined_call_operand.vmem [shape: f32[8,128], index: 0, kind: input, shape index: {}]
  %s1 = inlined_call_operand.vmem [shape: bf16[32,1], index: 1, kind: input, shape index: {}]
  %s2 = inlined_call_operand.vmem [shape: bf16[32,1], index: 2, kind: input, shape index: {}]
  %s3 = inlined_call_operand.vmem [shape: bf16[256,256], index: 3, kind: input, shape index: {}]
  %s4 = inlined_call_operand.vmem [shape: f32[256,1], index: 4, kind: input, shape index: {}]
  %s5 = inlined_call_operand.vmem [shape: bf16[8,256], index: 5, kind: input, shape index: {}]
  %s6 = inlined_call_operand.<no memory space> [shape: f32[1,1], index: 6, kind: input, shape index: {}]
  %s7 = inlined_call_operand.hbm [shape: f32[8,128], index: 7, kind: output, shape index: {}]
  %s8 = sld [smem:[#allocation0]]
  $region38: #{tpu_custom_call.1} parent=0
    _
  %s10 = ssub.s32 1, %s8
  %s11 = scalar_select 0, %s10, %s8
  %v12 = vstv %s6
  %13 = vst [vmem:[#allocation2] sm:$0x1] %v12
  $region1: #{tpu_custom_call.1} parent=0
    #allocation3 [shape = 'u8[4096]{0}', space=vmem, size = 0x1000, scoped, tag = 'output window, operand 0, single buffered']
    #allocation4 [shape = 's32[1]{0}', space=sflag, size = 0x4, scoped, tag = 'scoped memory for tpu_custom_call.1']
    %14 = vsyncpa [#allocation4], 0
    // Predicated region
    $region2: #{tpu_custom_call.1} parent=1 // pred_check
      _
    $region3: #{tpu_custom_call.1} parent=1 // pred_check_branch
      %16 = sbr.rel (0) target = $region5
    $region4: #{tpu_custom_call.1} parent=1 // pred_region
      _
    $region5: #{tpu_custom_call.1} parent=1 // pred_fallthru
      _
    // Predicated region
    $region6: #{tpu_custom_call.1} parent=1 // pred_check
      _
    $region7: #{tpu_custom_call.1} parent=1 // pred_check_branch
      %18 = sbr.rel (0) target = $region9
    $region8: #{tpu_custom_call.1} parent=1 // pred_region
      _
    $region9: #{tpu_custom_call.1} parent=1 // pred_fallthru
      _
    // Predicated region
    $region10: #{tpu_custom_call.1} parent=1 // pred_check
      _
    $region11: #{tpu_custom_call.1} parent=1 // pred_check_branch
      %20 = sbr.rel (0) target = $region13
    $region12: #{tpu_custom_call.1} parent=1 // pred_region
      _
    $region13: #{tpu_custom_call.1} parent=1 // pred_fallthru
      _
    // Predicated region
    $region14: #{tpu_custom_call.1} parent=1 // pred_check
      _
    $region15: #{tpu_custom_call.1} parent=1 // pred_check_branch
      %22 = sbr.rel (0) target = $region17
    $region16: #{tpu_custom_call.1} parent=1 // pred_region
      _
    $region17: #{tpu_custom_call.1} parent=1 // pred_fallthru
      _
    // Predicated region
    $region18: #{tpu_custom_call.1} parent=1 // pred_check
      _
    $region19: #{tpu_custom_call.1} parent=1 // pred_check_branch
      %24 = sbr.rel (0) target = $region21
    $region20: #{tpu_custom_call.1} parent=1 // pred_region
      _
    $region21: #{tpu_custom_call.1} parent=1 // pred_fallthru
      _
    // Predicated region
    $region22: #{tpu_custom_call.1} parent=1 // pred_check
      _
    $region23: #{tpu_custom_call.1} parent=1 // pred_check_branch
      %26 = sbr.rel (0) target = $region25
    $region24: #{tpu_custom_call.1} parent=1 // pred_region
      _
    $region25: #{tpu_custom_call.1} parent=1 // pred_fallthru
      _
    // Predicated region
    $region26: #{tpu_custom_call.1} parent=1 // pred_check
      _
    $region27: #{tpu_custom_call.1} parent=1 // pred_check_branch
      %28 = sbr.rel (0) target = $region29
    $region28: #{tpu_custom_call.1} parent=1 // pred_region
      _
    $region29: #{tpu_custom_call.1} parent=1 // pred_fallthru
      _
    %v30 = vld [vmem:[%s0] sm:$0xff]
    %v31 = vpack.c.bf16 %v30, %v30
    %v32 = vld [vmem:[%s1] sm:$0xf]
    %v33 = vld [vmem:[%s1 + $0x4] sm:$0xf]
    %v34 = vld [vmem:[%s1 + $0x8] sm:$0xf]
    %v35 = vld [vmem:[%s1 + $0xc] sm:$0xf]
    %v36 = vld [vmem:[%s2] sm:$0xf]
    %v37 = vld [vmem:[%s2 + $0x4] sm:$0xf]
    %v38 = vld [vmem:[%s2 + $0x8] sm:$0xf]
    %v39 = vld [vmem:[%s2 + $0xc] sm:$0xf]
    %v42 = vunpack.c.l.s4 1966171168
    %v43 = vunpack.c.0.s8 %v42
    %v44 = vlaneseq
    %v45 = vshrl.u32 %v44, 7
    %v46 = vsub.s32 %v43, %v45
    %v47 = vrot.slane %v31, %v46
    %v48 = vcombine.high %v47, %v47
    %v50 = vunpack.c.l.s4 1966171168
    %v51 = vunpack.c.0.s8 %v50
    %v52 = vlaneseq
    %v53 = vshrl.u32 %v52, 7
    %v54 = vsub.s32 %v51, %v53
    %v55 = vrot.slane %v47, %v54
    %v57 = vunpack.c.l.s4 1966171168
    %v58 = vunpack.c.0.s8 %v57
    %v59 = vlaneseq
    %v60 = vshrl.u32 %v59, 7
    %v61 = vsub.s32 %v58, %v60
    %v62 = vrot.slane %v48, %v61
    %v63 = vcombine.high %v55, %v55
    %v64 = vcombine.high %v62, %v62
    %v65 = vunpack.i.l.s16 %v55
    %v66 = vunpack.i.h.s16 %v55
    %v67 = vunpack.i.l.s16 %v62
    %v68 = vunpack.i.h.s16 %v62
    %v69 = vunpack.i.l.s16 %v63
    %v70 = vunpack.i.h.s16 %v63
    %v71 = vunpack.i.l.s16 %v64
    %v72 = vunpack.i.h.s16 %v64
    %74 = vset.pattern.permute.xlu0 0
    %75 = vperm.xlu0 %74, %v32
    %v76 = vpop.permute.xlu0 %75
    %v79 = vunpack.c.l.s4 839922192
    %v80 = vunpack.c.0.s8 %v79
    %v81 = vlaneseq
    %v82 = vshrl.u32 %v81, 7
    %v83 = vsub.s32 %v80, %v82
    %v84 = vrot.slane %v76, %v83
    %86 = vset.pattern.permute.xlu0 0
    %87 = vperm.xlu0 %86, %v33
    %v88 = vpop.permute.xlu0 %87
    %v91 = vunpack.c.l.s4 839922192
    %v92 = vunpack.c.0.s8 %v91
    %v93 = vlaneseq
    %v94 = vshrl.u32 %v93, 7
    %v95 = vsub.s32 %v92, %v94
    %v96 = vrot.slane %v88, %v95
    %98 = vset.pattern.permute.xlu0 0
    %99 = vperm.xlu0 %98, %v34
    %v100 = vpop.permute.xlu0 %99
    %v103 = vunpack.c.l.s4 839922192
    %v104 = vunpack.c.0.s8 %v103
    %v105 = vlaneseq
    %v106 = vshrl.u32 %v105, 7
    %v107 = vsub.s32 %v104, %v106
    %v108 = vrot.slane %v100, %v107
    %110 = vset.pattern.permute.xlu0 0
    %111 = vperm.xlu0 %110, %v35
    %v112 = vpop.permute.xlu0 %111
    %v115 = vunpack.c.l.s4 839922192
    %v116 = vunpack.c.0.s8 %v115
    %v117 = vlaneseq
    %v118 = vshrl.u32 %v117, 7
    %v119 = vsub.s32 %v116, %v118
    %v120 = vrot.slane %v112, %v119
    %v121 = vpack.i.b16 %v65, %v65
    %v122 = vpack.i.b16 %v66, %v66
    %v123 = vpack.i.b16 %v67, %v67
    %v124 = vpack.i.b16 %v68, %v68
    %v125 = vpack.i.b16 %v69, %v69
    %v126 = vpack.i.b16 %v70, %v70
    %v127 = vpack.i.b16 %v71, %v71
    %v128 = vpack.i.b16 %v72, %v72
    %v129 = vlaneseq
    %v130 = vshrl.u32 %v129, 7
    %v131 = vsub.s32 0, %v130
    %v132 = vrot.slane %v121, %v131
    %v133 = vlaneseq
    %v134 = vshrl.u32 %v133, 7
    %v135 = vsub.s32 0, %v134
    %v136 = vrot.slane %v122, %v135
    %v137 = vlaneseq
    %v138 = vshrl.u32 %v137, 7
    %v139 = vsub.s32 0, %v138
    %v140 = vrot.slane %v123, %v139
    %v141 = vlaneseq
    %v142 = vshrl.u32 %v141, 7
    %v143 = vsub.s32 0, %v142
    %v144 = vrot.slane %v124, %v143
    %v145 = vlaneseq
    %v146 = vshrl.u32 %v145, 7
    %v147 = vsub.s32 0, %v146
    %v148 = vrot.slane %v125, %v147
    %v149 = vlaneseq
    %v150 = vshrl.u32 %v149, 7
    %v151 = vsub.s32 0, %v150
    %v152 = vrot.slane %v126, %v151
    %v153 = vlaneseq
    %v154 = vshrl.u32 %v153, 7
    %v155 = vsub.s32 0, %v154
    %v156 = vrot.slane %v127, %v155
    %v157 = vlaneseq
    %v158 = vshrl.u32 %v157, 7
    %v159 = vsub.s32 0, %v158
    %v160 = vrot.slane %v128, %v159
    %v162 = vpack.i.b16 %v132, %v132
    %v164 = vlaneseq
    %v165 = vshrl.u32 %v164, 7
    %v166 = vsub.s32 0, %v165
    %v167 = vrot.slane %v162, %v166
    %v169 = vpack.i.b16 %v136, %v136
    %v171 = vlaneseq
    %v172 = vshrl.u32 %v171, 7
    %v173 = vsub.s32 0, %v172
    %v174 = vrot.slane %v169, %v173
    %v176 = vpack.i.b16 %v140, %v140
    %v178 = vlaneseq
    %v179 = vshrl.u32 %v178, 7
    %v180 = vsub.s32 0, %v179
    %v181 = vrot.slane %v176, %v180
    %v183 = vpack.i.b16 %v144, %v144
    %v185 = vlaneseq
    %v186 = vshrl.u32 %v185, 7
    %v187 = vsub.s32 0, %v186
    %v188 = vrot.slane %v183, %v187
    %v190 = vpack.i.b16 %v148, %v148
    %v192 = vlaneseq
    %v193 = vshrl.u32 %v192, 7
    %v194 = vsub.s32 0, %v193
    %v195 = vrot.slane %v190, %v194
    %v197 = vpack.i.b16 %v152, %v152
    %v199 = vlaneseq
    %v200 = vshrl.u32 %v199, 7
    %v201 = vsub.s32 0, %v200
    %v202 = vrot.slane %v197, %v201
    %v204 = vpack.i.b16 %v156, %v156
    %v206 = vlaneseq
    %v207 = vshrl.u32 %v206, 7
    %v208 = vsub.s32 0, %v207
    %v209 = vrot.slane %v204, %v208
    %v211 = vpack.i.b16 %v160, %v160
    %v213 = vlaneseq
    %v214 = vshrl.u32 %v213, 7
    %v215 = vsub.s32 0, %v214
    %v216 = vrot.slane %v211, %v215
    %v225 = vunpack.c.l.b16 %v167
    %v226 = vunpack.c.l.b16 %v174
    %v227 = vunpack.c.l.b16 %v181
    %v228 = vunpack.c.l.b16 %v188
    %v229 = vunpack.c.l.b16 %v195
    %v230 = vunpack.c.l.b16 %v202
    %v231 = vunpack.c.l.b16 %v209
    %v232 = vunpack.c.l.b16 %v216
    %v233 = vpack.c.b16 %v225, %v225
    %v234 = vpack.c.b16 %v226, %v226
    %v235 = vpack.c.b16 %v227, %v227
    %v236 = vpack.c.b16 %v228, %v228
    %v237 = vpack.c.b16 %v229, %v229
    %v238 = vpack.c.b16 %v230, %v230
    %v239 = vpack.c.b16 %v231, %v231
    %v240 = vpack.c.b16 %v232, %v232
    %v249 = vmul.bf16 %v84, %v233
    %v250 = vmul.bf16 %v96, %v233
    %v251 = vmul.bf16 %v108, %v233
    %v252 = vmul.bf16 %v120, %v233
    %v253 = vmul.bf16 %v84, %v234
    %v254 = vmul.bf16 %v96, %v234
    %v255 = vmul.bf16 %v108, %v234
    %v256 = vmul.bf16 %v120, %v234
    %v257 = vmul.bf16 %v84, %v235
    %v258 = vmul.bf16 %v96, %v235
    %v259 = vmul.bf16 %v108, %v235
    %v260 = vmul.bf16 %v120, %v235
    %v261 = vmul.bf16 %v84, %v236
    %v262 = vmul.bf16 %v96, %v236
    %v263 = vmul.bf16 %v108, %v236
    %v264 = vmul.bf16 %v120, %v236
    %v265 = vmul.bf16 %v84, %v237
    %v266 = vmul.bf16 %v96, %v237
    %v267 = vmul.bf16 %v108, %v237
    %v268 = vmul.bf16 %v120, %v237
    %v269 = vmul.bf16 %v84, %v238
    %v270 = vmul.bf16 %v96, %v238
    %v271 = vmul.bf16 %v108, %v238
    %v272 = vmul.bf16 %v120, %v238
    %v273 = vmul.bf16 %v84, %v239
    %v274 = vmul.bf16 %v96, %v239
    %v275 = vmul.bf16 %v108, %v239
    %v276 = vmul.bf16 %v120, %v239
    %v277 = vmul.bf16 %v84, %v240
    %v278 = vmul.bf16 %v96, %v240
    %v279 = vmul.bf16 %v108, %v240
    %v280 = vmul.bf16 %v120, %v240
    %282 = vset.pattern.permute.xlu0 0
    %283 = vperm.xlu0 %282, %v36
    %v284 = vpop.permute.xlu0 %283
    %v287 = vunpack.c.l.s4 839922192
    %v288 = vunpack.c.0.s8 %v287
    %v289 = vlaneseq
    %v290 = vshrl.u32 %v289, 7
    %v291 = vsub.s32 %v288, %v290
    %v292 = vrot.slane %v284, %v291
    %294 = vset.pattern.permute.xlu0 0
    %295 = vperm.xlu0 %294, %v37
    %v296 = vpop.permute.xlu0 %295
    %v299 = vunpack.c.l.s4 839922192
    %v300 = vunpack.c.0.s8 %v299
    %v301 = vlaneseq
    %v302 = vshrl.u32 %v301, 7
    %v303 = vsub.s32 %v300, %v302
    %v304 = vrot.slane %v296, %v303
    %306 = vset.pattern.permute.xlu0 0
    %307 = vperm.xlu0 %306, %v38
    %v308 = vpop.permute.xlu0 %307
    %v311 = vunpack.c.l.s4 839922192
    %v312 = vunpack.c.0.s8 %v311
    %v313 = vlaneseq
    %v314 = vshrl.u32 %v313, 7
    %v315 = vsub.s32 %v312, %v314
    %v316 = vrot.slane %v308, %v315
    %318 = vset.pattern.permute.xlu0 0
    %319 = vperm.xlu0 %318, %v39
    %v320 = vpop.permute.xlu0 %319
    %v323 = vunpack.c.l.s4 839922192
    %v324 = vunpack.c.0.s8 %v323
    %v325 = vlaneseq
    %v326 = vshrl.u32 %v325, 7
    %v327 = vsub.s32 %v324, %v326
    %v328 = vrot.slane %v320, %v327
    %v329 = vadd.bf16 %v249, %v292
    %v330 = vadd.bf16 %v250, %v304
    %v331 = vadd.bf16 %v251, %v316
    %v332 = vadd.bf16 %v252, %v328
    %v333 = vadd.bf16 %v253, %v292
    %v334 = vadd.bf16 %v254, %v304
    %v335 = vadd.bf16 %v255, %v316
    %v336 = vadd.bf16 %v256, %v328
    %v337 = vadd.bf16 %v257, %v292
    %v338 = vadd.bf16 %v258, %v304
    %v339 = vadd.bf16 %v259, %v316
    %v340 = vadd.bf16 %v260, %v328
    %v341 = vadd.bf16 %v261, %v292
    %v342 = vadd.bf16 %v262, %v304
    %v343 = vadd.bf16 %v263, %v316
    %v344 = vadd.bf16 %v264, %v328
    %v345 = vadd.bf16 %v265, %v292
    %v346 = vadd.bf16 %v266, %v304
    %v347 = vadd.bf16 %v267, %v316
    %v348 = vadd.bf16 %v268, %v328
    %v349 = vadd.bf16 %v269, %v292
    %v350 = vadd.bf16 %v270, %v304
    %v351 = vadd.bf16 %v271, %v316
    %v352 = vadd.bf16 %v272, %v328
    %v353 = vadd.bf16 %v273, %v292
    %v354 = vadd.bf16 %v274, %v304
    %v355 = vadd.bf16 %v275, %v316
    %v356 = vadd.bf16 %v276, %v328
    %v357 = vadd.bf16 %v277, %v292
    %v358 = vadd.bf16 %v278, %v304
    %v359 = vadd.bf16 %v279, %v316
    %v360 = vadd.bf16 %v280, %v328
    %v361 = vmax.bf16 %v329, 0
    %v362 = vmax.bf16 %v330, 0
    %v363 = vmax.bf16 %v331, 0
    %v364 = vmax.bf16 %v332, 0
    %v365 = vmax.bf16 %v333, 0
    %v366 = vmax.bf16 %v334, 0
    %v367 = vmax.bf16 %v335, 0
    %v368 = vmax.bf16 %v336, 0
    %v369 = vmax.bf16 %v337, 0
    %v370 = vmax.bf16 %v338, 0
    %v371 = vmax.bf16 %v339, 0
    %v372 = vmax.bf16 %v340, 0
    %v373 = vmax.bf16 %v341, 0
    %v374 = vmax.bf16 %v342, 0
    %v375 = vmax.bf16 %v343, 0
    %v376 = vmax.bf16 %v344, 0
    %v377 = vmax.bf16 %v345, 0
    %v378 = vmax.bf16 %v346, 0
    %v379 = vmax.bf16 %v347, 0
    %v380 = vmax.bf16 %v348, 0
    %v381 = vmax.bf16 %v349, 0
    %v382 = vmax.bf16 %v350, 0
    %v383 = vmax.bf16 %v351, 0
    %v384 = vmax.bf16 %v352, 0
    %v385 = vmax.bf16 %v353, 0
    %v386 = vmax.bf16 %v354, 0
    %v387 = vmax.bf16 %v355, 0
    %v388 = vmax.bf16 %v356, 0
    %v389 = vmax.bf16 %v357, 0
    %v390 = vmax.bf16 %v358, 0
    %v391 = vmax.bf16 %v359, 0
    %v392 = vmax.bf16 %v360, 0
    %v393 = vld [vmem:[%s3] sm:$0xff]
    %v394 = vld [vmem:[%s3 + $0x8] sm:$0xff]
    %v395 = vld [vmem:[%s3 + $0x10] sm:$0xff]
    %v396 = vld [vmem:[%s3 + $0x18] sm:$0xff]
    %v397 = vld [vmem:[%s3 + $0x20] sm:$0xff]
    %v398 = vld [vmem:[%s3 + $0x28] sm:$0xff]
    %v399 = vld [vmem:[%s3 + $0x30] sm:$0xff]
    %v400 = vld [vmem:[%s3 + $0x38] sm:$0xff]
    %v401 = vld [vmem:[%s3 + $0x40] sm:$0xff]
    %v402 = vld [vmem:[%s3 + $0x48] sm:$0xff]
    %v403 = vld [vmem:[%s3 + $0x50] sm:$0xff]
    %v404 = vld [vmem:[%s3 + $0x58] sm:$0xff]
    %v405 = vld [vmem:[%s3 + $0x60] sm:$0xff]
    %v406 = vld [vmem:[%s3 + $0x68] sm:$0xff]
    %v407 = vld [vmem:[%s3 + $0x70] sm:$0xff]
    %v408 = vld [vmem:[%s3 + $0x78] sm:$0xff]
    %v409 = vld [vmem:[%s3 + $0x80] sm:$0xff]
    %v410 = vld [vmem:[%s3 + $0x88] sm:$0xff]
    %v411 = vld [vmem:[%s3 + $0x90] sm:$0xff]
    %v412 = vld [vmem:[%s3 + $0x98] sm:$0xff]
    %v413 = vld [vmem:[%s3 + $0xa0] sm:$0xff]
    %v414 = vld [vmem:[%s3 + $0xa8] sm:$0xff]
    %v415 = vld [vmem:[%s3 + $0xb0] sm:$0xff]
    %v416 = vld [vmem:[%s3 + $0xb8] sm:$0xff]
    %v417 = vld [vmem:[%s3 + $0xc0] sm:$0xff]
    %v418 = vld [vmem:[%s3 + $0xc8] sm:$0xff]
    %v419 = vld [vmem:[%s3 + $0xd0] sm:$0xff]
    %v420 = vld [vmem:[%s3 + $0xd8] sm:$0xff]
    %v421 = vld [vmem:[%s3 + $0xe0] sm:$0xff]
    %v422 = vld [vmem:[%s3 + $0xe8] sm:$0xff]
    %v423 = vld [vmem:[%s3 + $0xf0] sm:$0xff]
    %v424 = vld [vmem:[%s3 + $0xf8] sm:$0xff]
    %v425 = vld [vmem:[%s4] sm:$0xff]
    %v426 = vld [vmem:[%s4 + $0x8] sm:$0xff]
    %v427 = vld [vmem:[%s4 + $0x10] sm:$0xff]
    %v428 = vld [vmem:[%s4 + $0x18] sm:$0xff]
    %v429 = vld [vmem:[%s4 + $0x20] sm:$0xff]
    %v430 = vld [vmem:[%s4 + $0x28] sm:$0xff]
    %v431 = vld [vmem:[%s4 + $0x30] sm:$0xff]
    %v432 = vld [vmem:[%s4 + $0x38] sm:$0xff]
    %v433 = vld [vmem:[%s4 + $0x40] sm:$0xff]
    %v434 = vld [vmem:[%s4 + $0x48] sm:$0xff]
    %v435 = vld [vmem:[%s4 + $0x50] sm:$0xff]
    %v436 = vld [vmem:[%s4 + $0x58] sm:$0xff]
    %v437 = vld [vmem:[%s4 + $0x60] sm:$0xff]
    %v438 = vld [vmem:[%s4 + $0x68] sm:$0xff]
    %v439 = vld [vmem:[%s4 + $0x70] sm:$0xff]
    %v440 = vld [vmem:[%s4 + $0x78] sm:$0xff]
    %v441 = vld [vmem:[%s4 + $0x80] sm:$0xff]
    %v442 = vld [vmem:[%s4 + $0x88] sm:$0xff]
    %v443 = vld [vmem:[%s4 + $0x90] sm:$0xff]
    %v444 = vld [vmem:[%s4 + $0x98] sm:$0xff]
    %v445 = vld [vmem:[%s4 + $0xa0] sm:$0xff]
    %v446 = vld [vmem:[%s4 + $0xa8] sm:$0xff]
    %v447 = vld [vmem:[%s4 + $0xb0] sm:$0xff]
    %v448 = vld [vmem:[%s4 + $0xb8] sm:$0xff]
    %v449 = vld [vmem:[%s4 + $0xc0] sm:$0xff]
    %v450 = vld [vmem:[%s4 + $0xc8] sm:$0xff]
    %v451 = vld [vmem:[%s4 + $0xd0] sm:$0xff]
    %v452 = vld [vmem:[%s4 + $0xd8] sm:$0xff]
    %v453 = vld [vmem:[%s4 + $0xe0] sm:$0xff]
    %v454 = vld [vmem:[%s4 + $0xe8] sm:$0xff]
    %v455 = vld [vmem:[%s4 + $0xf0] sm:$0xff]
    %v456 = vld [vmem:[%s4 + $0xf8] sm:$0xff]
    %458 = vset.pattern.permute.xlu0 0
    %459 = vperm.xlu0 %458, %v425
    %v460 = vpop.permute.xlu0 %459
    %463 = vset.pattern.permute.xlu0 0
    %464 = vperm.xlu0 %463, %v426
    %v465 = vpop.permute.xlu0 %464
    %468 = vset.pattern.permute.xlu0 0
    %469 = vperm.xlu0 %468, %v427
    %v470 = vpop.permute.xlu0 %469
    %473 = vset.pattern.permute.xlu0 0
    %474 = vperm.xlu0 %473, %v428
    %v475 = vpop.permute.xlu0 %474
    %478 = vset.pattern.permute.xlu0 0
    %479 = vperm.xlu0 %478, %v429
    %v480 = vpop.permute.xlu0 %479
    %483 = vset.pattern.permute.xlu0 0
    %484 = vperm.xlu0 %483, %v430
    %v485 = vpop.permute.xlu0 %484
    %488 = vset.pattern.permute.xlu0 0
    %489 = vperm.xlu0 %488, %v431
    %v490 = vpop.permute.xlu0 %489
    %493 = vset.pattern.permute.xlu0 0
    %494 = vperm.xlu0 %493, %v432
    %v495 = vpop.permute.xlu0 %494
    %498 = vset.pattern.permute.xlu0 0
    %499 = vperm.xlu0 %498, %v433
    %v500 = vpop.permute.xlu0 %499
    %503 = vset.pattern.permute.xlu0 0
    %504 = vperm.xlu0 %503, %v434
    %v505 = vpop.permute.xlu0 %504
    %508 = vset.pattern.permute.xlu0 0
    %509 = vperm.xlu0 %508, %v435
    %v510 = vpop.permute.xlu0 %509
    %513 = vset.pattern.permute.xlu0 0
    %514 = vperm.xlu0 %513, %v436
    %v515 = vpop.permute.xlu0 %514
    %518 = vset.pattern.permute.xlu0 0
    %519 = vperm.xlu0 %518, %v437
    %v520 = vpop.permute.xlu0 %519
    %523 = vset.pattern.permute.xlu0 0
    %524 = vperm.xlu0 %523, %v438
    %v525 = vpop.permute.xlu0 %524
    %528 = vset.pattern.permute.xlu0 0
    %529 = vperm.xlu0 %528, %v439
    %v530 = vpop.permute.xlu0 %529
    %533 = vset.pattern.permute.xlu0 0
    %534 = vperm.xlu0 %533, %v440
    %v535 = vpop.permute.xlu0 %534
    %538 = vset.pattern.permute.xlu0 0
    %539 = vperm.xlu0 %538, %v441
    %v540 = vpop.permute.xlu0 %539
    %543 = vset.pattern.permute.xlu0 0
    %544 = vperm.xlu0 %543, %v442
    %v545 = vpop.permute.xlu0 %544
    %548 = vset.pattern.permute.xlu0 0
    %549 = vperm.xlu0 %548, %v443
    %v550 = vpop.permute.xlu0 %549
    %553 = vset.pattern.permute.xlu0 0
    %554 = vperm.xlu0 %553, %v444
    %v555 = vpop.permute.xlu0 %554
    %558 = vset.pattern.permute.xlu0 0
    %559 = vperm.xlu0 %558, %v445
    %v560 = vpop.permute.xlu0 %559
    %563 = vset.pattern.permute.xlu0 0
    %564 = vperm.xlu0 %563, %v446
    %v565 = vpop.permute.xlu0 %564
    %568 = vset.pattern.permute.xlu0 0
    %569 = vperm.xlu0 %568, %v447
    %v570 = vpop.permute.xlu0 %569
    %573 = vset.pattern.permute.xlu0 0
    %574 = vperm.xlu0 %573, %v448
    %v575 = vpop.permute.xlu0 %574
    %578 = vset.pattern.permute.xlu0 0
    %579 = vperm.xlu0 %578, %v449
    %v580 = vpop.permute.xlu0 %579
    %583 = vset.pattern.permute.xlu0 0
    %584 = vperm.xlu0 %583, %v450
    %v585 = vpop.permute.xlu0 %584
    %588 = vset.pattern.permute.xlu0 0
    %589 = vperm.xlu0 %588, %v451
    %v590 = vpop.permute.xlu0 %589
    %593 = vset.pattern.permute.xlu0 0
    %594 = vperm.xlu0 %593, %v452
    %v595 = vpop.permute.xlu0 %594
    %598 = vset.pattern.permute.xlu0 0
    %599 = vperm.xlu0 %598, %v453
    %v600 = vpop.permute.xlu0 %599
    %603 = vset.pattern.permute.xlu0 0
    %604 = vperm.xlu0 %603, %v454
    %v605 = vpop.permute.xlu0 %604
    %608 = vset.pattern.permute.xlu0 0
    %609 = vperm.xlu0 %608, %v455
    %v610 = vpop.permute.xlu0 %609
    %613 = vset.pattern.permute.xlu0 0
    %614 = vperm.xlu0 %613, %v456
    %v615 = vpop.permute.xlu0 %614
    %v649 = vunpack.c.l.b16 %v393
    %v650 = vunpack.c.h.b16 %v393
    %v651 = vunpack.c.l.b16 %v394
    %v652 = vunpack.c.h.b16 %v394
    %v653 = vunpack.c.l.b16 %v395
    %v654 = vunpack.c.h.b16 %v395
    %v655 = vunpack.c.l.b16 %v396
    %v656 = vunpack.c.h.b16 %v396
    %v657 = vunpack.c.l.b16 %v397
    %v658 = vunpack.c.h.b16 %v397
    %v659 = vunpack.c.l.b16 %v398
    %v660 = vunpack.c.h.b16 %v398
    %v661 = vunpack.c.l.b16 %v399
    %v662 = vunpack.c.h.b16 %v399
    %v663 = vunpack.c.l.b16 %v400
    %v664 = vunpack.c.h.b16 %v400
    %v665 = vunpack.c.l.b16 %v401
    %v666 = vunpack.c.h.b16 %v401
    %v667 = vunpack.c.l.b16 %v402
    %v668 = vunpack.c.h.b16 %v402
    %v669 = vunpack.c.l.b16 %v403
    %v670 = vunpack.c.h.b16 %v403
    %v671 = vunpack.c.l.b16 %v404
    %v672 = vunpack.c.h.b16 %v404
    %v673 = vunpack.c.l.b16 %v405
    %v674 = vunpack.c.h.b16 %v405
    %v675 = vunpack.c.l.b16 %v406
    %v676 = vunpack.c.h.b16 %v406
    %v677 = vunpack.c.l.b16 %v407
    %v678 = vunpack.c.h.b16 %v407
    %v679 = vunpack.c.l.b16 %v408
    %v680 = vunpack.c.h.b16 %v408
    %v681 = vunpack.c.l.b16 %v409
    %v682 = vunpack.c.h.b16 %v409
    %v683 = vunpack.c.l.b16 %v410
    %v684 = vunpack.c.h.b16 %v410
    %v685 = vunpack.c.l.b16 %v411
    %v686 = vunpack.c.h.b16 %v411
    %v687 = vunpack.c.l.b16 %v412
    %v688 = vunpack.c.h.b16 %v412
    %v689 = vunpack.c.l.b16 %v413
    %v690 = vunpack.c.h.b16 %v413
    %v691 = vunpack.c.l.b16 %v414
    %v692 = vunpack.c.h.b16 %v414
    %v693 = vunpack.c.l.b16 %v415
    %v694 = vunpack.c.h.b16 %v415
    %v695 = vunpack.c.l.b16 %v416
    %v696 = vunpack.c.h.b16 %v416
    %v697 = vunpack.c.l.b16 %v417
    %v698 = vunpack.c.h.b16 %v417
    %v699 = vunpack.c.l.b16 %v418
    %v700 = vunpack.c.h.b16 %v418
    %v701 = vunpack.c.l.b16 %v419
    %v702 = vunpack.c.h.b16 %v419
    %v703 = vunpack.c.l.b16 %v420
    %v704 = vunpack.c.h.b16 %v420
    %v705 = vunpack.c.l.b16 %v421
    %v706 = vunpack.c.h.b16 %v421
    %v707 = vunpack.c.l.b16 %v422
    %v708 = vunpack.c.h.b16 %v422
    %v709 = vunpack.c.l.b16 %v423
    %v710 = vunpack.c.h.b16 %v423
    %v711 = vunpack.c.l.b16 %v424
    %v712 = vunpack.c.h.b16 %v424
    %v713 = vpack.c.b16 %v651, %v649
    %v714 = vpack.c.b16 %v652, %v650
    %v715 = vpack.c.b16 %v655, %v653
    %v716 = vpack.c.b16 %v656, %v654
    %v717 = vpack.c.b16 %v659, %v657
    %v718 = vpack.c.b16 %v660, %v658
    %v719 = vpack.c.b16 %v663, %v661
    %v720 = vpack.c.b16 %v664, %v662
    %v721 = vpack.c.b16 %v667, %v665
    %v722 = vpack.c.b16 %v668, %v666
    %v723 = vpack.c.b16 %v671, %v669
    %v724 = vpack.c.b16 %v672, %v670
    %v725 = vpack.c.b16 %v675, %v673
    %v726 = vpack.c.b16 %v676, %v674
    %v727 = vpack.c.b16 %v679, %v677
    %v728 = vpack.c.b16 %v680, %v678
    %v729 = vpack.c.b16 %v683, %v681
    %v730 = vpack.c.b16 %v684, %v682
    %v731 = vpack.c.b16 %v687, %v685
    %v732 = vpack.c.b16 %v688, %v686
    %v733 = vpack.c.b16 %v691, %v689
    %v734 = vpack.c.b16 %v692, %v690
    %v735 = vpack.c.b16 %v695, %v693
    %v736 = vpack.c.b16 %v696, %v694
    %v737 = vpack.c.b16 %v699, %v697
    %v738 = vpack.c.b16 %v700, %v698
    %v739 = vpack.c.b16 %v703, %v701
    %v740 = vpack.c.b16 %v704, %v702
    %v741 = vpack.c.b16 %v707, %v705
    %v742 = vpack.c.b16 %v708, %v706
    %v743 = vpack.c.b16 %v711, %v709
    %v744 = vpack.c.b16 %v712, %v710
    %v809 = vunpack.c.l.b16 %v361
    %v810 = vunpack.c.l.b16 %v362
    %v811 = vunpack.c.l.b16 %v363
    %v812 = vunpack.c.l.b16 %v364
    %v813 = vunpack.c.l.b16 %v365
    %v814 = vunpack.c.l.b16 %v366
    %v815 = vunpack.c.l.b16 %v367
    %v816 = vunpack.c.l.b16 %v368
    %v817 = vunpack.c.l.b16 %v369
    %v818 = vunpack.c.l.b16 %v370
    %v819 = vunpack.c.l.b16 %v371
    %v820 = vunpack.c.l.b16 %v372
    %v821 = vunpack.c.l.b16 %v373
    %v822 = vunpack.c.l.b16 %v374
    %v823 = vunpack.c.l.b16 %v375
    %v824 = vunpack.c.l.b16 %v376
    %v825 = vunpack.c.l.b16 %v377
    %v826 = vunpack.c.l.b16 %v378
    %v827 = vunpack.c.l.b16 %v379
    %v828 = vunpack.c.l.b16 %v380
    %v829 = vunpack.c.l.b16 %v381
    %v830 = vunpack.c.l.b16 %v382
    %v831 = vunpack.c.l.b16 %v383
    %v832 = vunpack.c.l.b16 %v384
    %v833 = vunpack.c.l.b16 %v385
    %v834 = vunpack.c.l.b16 %v386
    %v835 = vunpack.c.l.b16 %v387
    %v836 = vunpack.c.l.b16 %v388
    %v837 = vunpack.c.l.b16 %v389
    %v838 = vunpack.c.l.b16 %v390
    %v839 = vunpack.c.l.b16 %v391
    %v840 = vunpack.c.l.b16 %v392
    %v841 = vpack.c.b16 %v810, %v809
    %v842 = vpack.c.b16 %v812, %v811
    %v843 = vpack.c.b16 %v814, %v813
    %v844 = vpack.c.b16 %v816, %v815
    %v845 = vpack.c.b16 %v818, %v817
    %v846 = vpack.c.b16 %v820, %v819
    %v847 = vpack.c.b16 %v822, %v821
    %v848 = vpack.c.b16 %v824, %v823
    %v849 = vpack.c.b16 %v826, %v825
    %v850 = vpack.c.b16 %v828, %v827
    %v851 = vpack.c.b16 %v830, %v829
    %v852 = vpack.c.b16 %v832, %v831
    %v853 = vpack.c.b16 %v834, %v833
    %v854 = vpack.c.b16 %v836, %v835
    %v855 = vpack.c.b16 %v838, %v837
    %v856 = vpack.c.b16 %v840, %v839
    %873 = vmatprep.subr.bf16.mxu0 0
    %874 = vmatpush1.bf16.msra.mxu0 %v848
    %875 = vmatprep.subr.bf16.mxu0 0
    %876 = vmatpush1.bf16.msra.mxu0 %v847
    %877 = vmatprep.subr.bf16.mxu0 0
    %878 = vmatpush1.bf16.msra.mxu0 %v846
    %879 = vmatprep.subr.bf16.mxu0 0
    %880 = vmatpush1.bf16.msra.mxu0 %v845
    %881 = vmatprep.subr.bf16.mxu0 0
    %882 = vmatpush1.bf16.msra.mxu0 %v844
    %883 = vmatprep.subr.bf16.mxu0 0
    %884 = vmatpush1.bf16.msra.mxu0 %v843
    %885 = vmatprep.subr.bf16.mxu0 0
    %886 = vmatpush1.bf16.msra.mxu0 %v842
    %887 = vmatprep.subr.bf16.mxu0 0
    %888 = vmatpush1.bf16.msra.mxu0 %v841
    %889 = vmatprep.subr.bf16.mxu0 0
    %890 = vmatpush2.bf16.msra.mxu0 %v856
    %891 = vmatprep.subr.bf16.mxu0 0
    %892 = vmatpush2.bf16.msra.mxu0 %v855
    %893 = vmatprep.subr.bf16.mxu0 0
    %894 = vmatpush2.bf16.msra.mxu0 %v854
    %895 = vmatprep.subr.bf16.mxu0 0
    %896 = vmatpush2.bf16.msra.mxu0 %v853
    %897 = vmatprep.subr.bf16.mxu0 0
    %898 = vmatpush2.bf16.msra.mxu0 %v852
    %899 = vmatprep.subr.bf16.mxu0 0
    %900 = vmatpush2.bf16.msra.mxu0 %v851
    %901 = vmatprep.subr.bf16.mxu0 0
    %902 = vmatpush2.bf16.msra.mxu0 %v850
    %903 = vmatprep.subr.bf16.mxu0 0
    %904 = vmatpush2.bf16.msra.mxu0 %v849
    %905 = vmatprep.mubr.bf16.mxu0 %v714
    %906 = vmatmul.mubr.bf16.gmra.mxu0 %v713
    %v907 = vpop.f32.mrf.mxu0
    %v908 = vadd.f32 %v460, %v907
    %v909 = vpop.f32.mrf.mxu0
    %v910 = vpop.f32.mrf.mxu0
    %v911 = vadd.f32 %v465, %v910
    %v912 = vpop.f32.mrf.mxu0
    %913 = vmatprep.mubr.bf16.mxu0 %v716
    %914 = vmatmul.mubr.bf16.gmra.mxu0 %v715
    %v915 = vpop.f32.mrf.mxu0
    %v916 = vadd.f32 %v470, %v915
    %v917 = vpop.f32.mrf.mxu0
    %v918 = vpop.f32.mrf.mxu0
    %v919 = vadd.f32 %v475, %v918
    %v920 = vpop.f32.mrf.mxu0
    %921 = vmatprep.mubr.bf16.mxu0 %v718
    %922 = vmatmul.mubr.bf16.gmra.mxu0 %v717
    %v923 = vpop.f32.mrf.mxu0
    %v924 = vadd.f32 %v480, %v923
    %v925 = vpop.f32.mrf.mxu0
    %v926 = vpop.f32.mrf.mxu0
    %v927 = vadd.f32 %v485, %v926
    %v928 = vpop.f32.mrf.mxu0
    %929 = vmatprep.mubr.bf16.mxu0 %v720
    %930 = vmatmul.mubr.bf16.gmra.mxu0 %v719
    %v931 = vpop.f32.mrf.mxu0
    %v932 = vadd.f32 %v490, %v931
    %v933 = vpop.f32.mrf.mxu0
    %v934 = vpop.f32.mrf.mxu0
    %v935 = vadd.f32 %v495, %v934
    %v936 = vpop.f32.mrf.mxu0
    %937 = vmatprep.mubr.bf16.mxu0 %v722
    %938 = vmatmul.mubr.bf16.gmra.mxu0 %v721
    %v939 = vpop.f32.mrf.mxu0
    %v940 = vadd.f32 %v500, %v939
    %v941 = vpop.f32.mrf.mxu0
    %v942 = vpop.f32.mrf.mxu0
    %v943 = vadd.f32 %v505, %v942
    %v944 = vpop.f32.mrf.mxu0
    %945 = vmatprep.mubr.bf16.mxu0 %v724
    %946 = vmatmul.mubr.bf16.gmra.mxu0 %v723
    %v947 = vpop.f32.mrf.mxu0
    %v948 = vadd.f32 %v510, %v947
    %v949 = vpop.f32.mrf.mxu0
    %v950 = vpop.f32.mrf.mxu0
    %v951 = vadd.f32 %v515, %v950
    %v952 = vpop.f32.mrf.mxu0
    %953 = vmatprep.mubr.bf16.mxu0 %v726
    %954 = vmatmul.mubr.bf16.gmra.mxu0 %v725
    %v955 = vpop.f32.mrf.mxu0
    %v956 = vadd.f32 %v520, %v955
    %v957 = vpop.f32.mrf.mxu0
    %v958 = vpop.f32.mrf.mxu0
    %v959 = vadd.f32 %v525, %v958
    %v960 = vpop.f32.mrf.mxu0
    %961 = vmatprep.mubr.bf16.mxu0 %v728
    %962 = vmatmul.mubr.bf16.gmra.mxu0 %v727
    %v963 = vpop.f32.mrf.mxu0
    %v964 = vadd.f32 %v530, %v963
    %v965 = vpop.f32.mrf.mxu0
    %v966 = vpop.f32.mrf.mxu0
    %v967 = vadd.f32 %v535, %v966
    %v968 = vpop.f32.mrf.mxu0
    %969 = vmatprep.mubr.bf16.mxu0 %v730
    %970 = vmatmul.mubr.bf16.gmra.mxu0 %v729
    %v971 = vpop.f32.mrf.mxu0
    %v972 = vadd.f32 %v540, %v971
    %v973 = vpop.f32.mrf.mxu0
    %v974 = vpop.f32.mrf.mxu0
    %v975 = vadd.f32 %v545, %v974
    %v976 = vpop.f32.mrf.mxu0
    %977 = vmatprep.mubr.bf16.mxu0 %v732
    %978 = vmatmul.mubr.bf16.gmra.mxu0 %v731
    %v979 = vpop.f32.mrf.mxu0
    %v980 = vadd.f32 %v550, %v979
    %v981 = vpop.f32.mrf.mxu0
    %v982 = vpop.f32.mrf.mxu0
    %v983 = vadd.f32 %v555, %v982
    %v984 = vpop.f32.mrf.mxu0
    %985 = vmatprep.mubr.bf16.mxu0 %v734
    %986 = vmatmul.mubr.bf16.gmra.mxu0 %v733
    %v987 = vpop.f32.mrf.mxu0
    %v988 = vadd.f32 %v560, %v987
    %v989 = vpop.f32.mrf.mxu0
    %v990 = vpop.f32.mrf.mxu0
    %v991 = vadd.f32 %v565, %v990
    %v992 = vpop.f32.mrf.mxu0
    %993 = vmatprep.mubr.bf16.mxu0 %v736
    %994 = vmatmul.mubr.bf16.gmra.mxu0 %v735
    %v995 = vpop.f32.mrf.mxu0
    %v996 = vadd.f32 %v570, %v995
    %v997 = vpop.f32.mrf.mxu0
    %v998 = vpop.f32.mrf.mxu0
    %v999 = vadd.f32 %v575, %v998
    %v1000 = vpop.f32.mrf.mxu0
    %1001 = vmatprep.mubr.bf16.mxu0 %v738
    %1002 = vmatmul.mubr.bf16.gmra.mxu0 %v737
    %v1003 = vpop.f32.mrf.mxu0
    %v1004 = vadd.f32 %v580, %v1003
    %v1005 = vpop.f32.mrf.mxu0
    %v1006 = vpop.f32.mrf.mxu0
    %v1007 = vadd.f32 %v585, %v1006
    %v1008 = vpop.f32.mrf.mxu0
    %1009 = vmatprep.mubr.bf16.mxu0 %v740
    %1010 = vmatmul.mubr.bf16.gmra.mxu0 %v739
    %v1011 = vpop.f32.mrf.mxu0
    %v1012 = vadd.f32 %v590, %v1011
    %v1013 = vpop.f32.mrf.mxu0
    %v1014 = vpop.f32.mrf.mxu0
    %v1015 = vadd.f32 %v595, %v1014
    %v1016 = vpop.f32.mrf.mxu0
    %1017 = vmatprep.mubr.bf16.mxu0 %v742
    %1018 = vmatmul.mubr.bf16.gmra.mxu0 %v741
    %v1019 = vpop.f32.mrf.mxu0
    %v1020 = vadd.f32 %v600, %v1019
    %v1021 = vpop.f32.mrf.mxu0
    %v1022 = vpop.f32.mrf.mxu0
    %v1023 = vadd.f32 %v605, %v1022
    %v1024 = vpop.f32.mrf.mxu0
    %1025 = vmatprep.mubr.bf16.mxu0 %v744
    %1026 = vmatmul.mubr.bf16.gmra.mxu0 %v743
    %v1027 = vpop.f32.mrf.mxu0
    %v1028 = vadd.f32 %v610, %v1027
    %v1029 = vpop.f32.mrf.mxu0
    %v1030 = vpop.f32.mrf.mxu0
    %v1031 = vadd.f32 %v615, %v1030
    %v1032 = vpop.f32.mrf.mxu0
    %1033 = vdwg.mxu0
    %v1034 = vmax.f32 %v908, 0.0
    %v1035 = vmax.f32 %v911, 0.0
    %v1036 = vmax.f32 %v916, 0.0
    %v1037 = vmax.f32 %v919, 0.0
    %v1038 = vmax.f32 %v924, 0.0
    %v1039 = vmax.f32 %v927, 0.0
    %v1040 = vmax.f32 %v932, 0.0
    %v1041 = vmax.f32 %v935, 0.0
    %v1042 = vmax.f32 %v940, 0.0
    %v1043 = vmax.f32 %v943, 0.0
    %v1044 = vmax.f32 %v948, 0.0
    %v1045 = vmax.f32 %v951, 0.0
    %v1046 = vmax.f32 %v956, 0.0
    %v1047 = vmax.f32 %v959, 0.0
    %v1048 = vmax.f32 %v964, 0.0
    %v1049 = vmax.f32 %v967, 0.0
    %v1050 = vmax.f32 %v972, 0.0
    %v1051 = vmax.f32 %v975, 0.0
    %v1052 = vmax.f32 %v980, 0.0
    %v1053 = vmax.f32 %v983, 0.0
    %v1054 = vmax.f32 %v988, 0.0
    %v1055 = vmax.f32 %v991, 0.0
    %v1056 = vmax.f32 %v996, 0.0
    %v1057 = vmax.f32 %v999, 0.0
    %v1058 = vmax.f32 %v1004, 0.0
    %v1059 = vmax.f32 %v1007, 0.0
    %v1060 = vmax.f32 %v1012, 0.0
    %v1061 = vmax.f32 %v1015, 0.0
    %v1062 = vmax.f32 %v1020, 0.0
    %v1063 = vmax.f32 %v1023, 0.0
    %v1064 = vmax.f32 %v1028, 0.0
    %v1065 = vmax.f32 %v1031, 0.0
    %v1066 = vpack.c.bf16 %v1035, %v1034
    %v1067 = vpack.c.bf16 %v1037, %v1036
    %v1068 = vpack.c.bf16 %v1039, %v1038
    %v1069 = vpack.c.bf16 %v1041, %v1040
    %v1070 = vpack.c.bf16 %v1043, %v1042
    %v1071 = vpack.c.bf16 %v1045, %v1044
    %v1072 = vpack.c.bf16 %v1047, %v1046
    %v1073 = vpack.c.bf16 %v1049, %v1048
    %v1074 = vpack.c.bf16 %v1051, %v1050
    %v1075 = vpack.c.bf16 %v1053, %v1052
    %v1076 = vpack.c.bf16 %v1055, %v1054
    %v1077 = vpack.c.bf16 %v1057, %v1056
    %v1078 = vpack.c.bf16 %v1059, %v1058
    %v1079 = vpack.c.bf16 %v1061, %v1060
    %v1080 = vpack.c.bf16 %v1063, %v1062
    %v1081 = vpack.c.bf16 %v1065, %v1064
    %v1082 = vld [vmem:[%s5] sm:$0xff]
    %v1083 = vld [vmem:[#allocation2] sm:$0x1]
    %v1085 = vlaneseq
    %v1086 = vshrl.u32 %v1085, 7
    %v1087 = vsub.s32 0, %v1086
    %v1088 = vrot.slane %v1083, %v1087
    %1089 = vset.pattern.permute.xlu0 0
    %1090 = vperm.xlu0 %1089, %v1088
    %v1091 = vpop.permute.xlu0 %1090
    %v1094 = vunpack.c.l.b16 %v1082
    %v1095 = vunpack.c.h.b16 %v1082
    %v1096 = vpack.c.b16 %v1094, %v1094
    %v1097 = vpack.c.b16 %v1095, %v1095
    %1100 = vmatprep.subr.bf16.mxu0 0
    %1101 = vmatpush1.bf16.msra.mxu0 %v1073
    %1102 = vmatprep.subr.bf16.mxu0 0
    %1103 = vmatpush1.bf16.msra.mxu0 %v1072
    %1104 = vmatprep.subr.bf16.mxu0 0
    %1105 = vmatpush1.bf16.msra.mxu0 %v1071
    %1106 = vmatprep.subr.bf16.mxu0 0
    %1107 = vmatpush1.bf16.msra.mxu0 %v1070
    %1108 = vmatprep.subr.bf16.mxu0 0
    %1109 = vmatpush1.bf16.msra.mxu0 %v1069
    %1110 = vmatprep.subr.bf16.mxu0 0
    %1111 = vmatpush1.bf16.msra.mxu0 %v1068
    %1112 = vmatprep.subr.bf16.mxu0 0
    %1113 = vmatpush1.bf16.msra.mxu0 %v1067
    %1114 = vmatprep.subr.bf16.mxu0 0
    %1115 = vmatpush1.bf16.msra.mxu0 %v1066
    %1116 = vmatprep.subr.bf16.mxu0 0
    %1117 = vmatpush2.bf16.msra.mxu0 %v1081
    %1118 = vmatprep.subr.bf16.mxu0 0
    %1119 = vmatpush2.bf16.msra.mxu0 %v1080
    %1120 = vmatprep.subr.bf16.mxu0 0
    %1121 = vmatpush2.bf16.msra.mxu0 %v1079
    %1122 = vmatprep.subr.bf16.mxu0 0
    %1123 = vmatpush2.bf16.msra.mxu0 %v1078
    %1124 = vmatprep.subr.bf16.mxu0 0
    %1125 = vmatpush2.bf16.msra.mxu0 %v1077
    %1126 = vmatprep.subr.bf16.mxu0 0
    %1127 = vmatpush2.bf16.msra.mxu0 %v1076
    %1128 = vmatprep.subr.bf16.mxu0 0
    %1129 = vmatpush2.bf16.msra.mxu0 %v1075
    %1130 = vmatprep.subr.bf16.mxu0 0
    %1131 = vmatpush2.bf16.msra.mxu0 %v1074
    %1132 = vmatprep.mubr.bf16.mxu0 %v1097
    %1133 = vmatmul.mubr.bf16.gmra.mxu0 %v1096
    %v1134 = vpop.f32.mrf.mxu0
    %v1135 = vadd.f32 %v1091, %v1134
    %v1136 = vpop.f32.mrf.mxu0
    %v1137 = vpop.f32.mrf.mxu0
    %v1138 = vpop.f32.mrf.mxu0
    %1139 = vdwg.mxu0
    %1140 = vst [vmem:[#allocation3] sm:$0xff] %v1135
    // Predicated region
    $region30: #{tpu_custom_call.1} parent=1 // pred_check
      _
    $region31: #{tpu_custom_call.1} parent=1 // pred_check_branch
      %1142 = sbr.rel (0) target = $region33
    $region32: #{tpu_custom_call.1} parent=1 // pred_region
      %s1144 = ssub.s32 128, 128
      %1145 = vsyncadd [#allocation4], %s1144
      %s1147 = sshll.u32 [#allocation3], 4
      %s1148 = int_to_ptr.vmem [resolvable:$true] %s1147
      %1150 = dma.vmem_to_hbm [thread:$0]  %s1148, 128, %s7, [#allocation4]
    $region33: #{tpu_custom_call.1} parent=1 // pred_fallthru
      _
    // Predicated region
    $region34: #{tpu_custom_call.1} parent=1 // pred_check
      _
    $region35: #{tpu_custom_call.1} parent=1 // pred_check_branch
      %1152 = sbr.rel (0) target = $region37
    $region36: #{tpu_custom_call.1} parent=1 // pred_region
      %1153 = dma.done [#allocation4], 128
    $region37: #{tpu_custom_call.1} parent=1 // pred_fallthru
      _
    %1154 = vsyncpa [#allocation4], 1

</llo_original>
